<compile_context>
chip_gen: v6e
topology: v6e:2x2x1
jax: 0.10.0
libtpu: 0.0.40
codegen_flags: <defaults>
</compile_context>

<pallas_src>
import jax
import jax.numpy as jnp
from jax.experimental import pallas as pl
from jax.experimental.pallas import tpu as pltpu

_EPS = 1e-5
_MIN_SPLIT_BYTES = 2 * 1024 * 1024   # below this, a single grid step is fine


def _round_up(n, m):
    return ((n + m - 1) // m) * m


def _chip_budget():
    """Returns (target_block_bytes, vmem_limit_bytes) tuned per TPU generation."""
    vmem_cap = None
    try:
        info = pltpu.get_tpu_info()
        vmem_cap = getattr(info, "vmem_capacity_bytes", None)
    except Exception:
        vmem_cap = None
    if vmem_cap is None:
        vmem_cap = 64 * 1024 * 1024           # conservative (v7x-sized) default
    if vmem_cap >= 96 * 1024 * 1024:
        # v5e / v6e: 128 MiB physical VMEM per TensorCore -> generous limit.
        return 4 * 1024 * 1024, 64 * 1024 * 1024
    # v7x: 64 MiB physical VMEM, 3.2 TB/s HBM -> big blocks, capped limit so
    # double-buffered in+out plus f32 scratch still fit.
    return 4 * 1024 * 1024, 48 * 1024 * 1024


# ----------------------------------------------------------------------------
# Kernels (one-pass statistics, f32 accumulation)
# ----------------------------------------------------------------------------

def _ln_last_kernel(x_ref, w_ref, b_ref, o_ref):
    # x_ref/o_ref: (TILE_N, C); w_ref/b_ref: (1, C). Normalize over last axis.
    x = x_ref[...].astype(jnp.float32)
    mu = jnp.mean(x, axis=-1, keepdims=True)
    m2 = jnp.mean(x * x, axis=-1, keepdims=True)
    var = jnp.maximum(m2 - mu * mu, 0.0)            # unbiased=False, one pass
    inv = jax.lax.rsqrt(var + _EPS)                 # EUP slot (~free)
    w = w_ref[...].astype(jnp.float32)
    b = b_ref[...].astype(jnp.float32)
    o_ref[...] = ((x - mu) * inv * w + b).astype(o_ref.dtype)


def _ln_channel_kernel(x_ref, w_ref, b_ref, o_ref):
    # x_ref/o_ref: (TILE_B, C, TILE_HW); w_ref/b_ref: (C, 1).
    # Normalize over the channel (sublane) axis; spatial stays on lanes.
    x = x_ref[...].astype(jnp.float32)
    mu = jnp.mean(x, axis=1, keepdims=True)
    m2 = jnp.mean(x * x, axis=1, keepdims=True)
    var = jnp.maximum(m2 - mu * mu, 0.0)            # unbiased=False, one pass
    inv = jax.lax.rsqrt(var + _EPS)
    w = w_ref[...].astype(jnp.float32)              # (C, 1) broadcasts
    b = b_ref[...].astype(jnp.float32)
    o_ref[...] = ((x - mu) * inv * w + b).astype(o_ref.dtype)


# ----------------------------------------------------------------------------
# Wrappers
# ----------------------------------------------------------------------------

def with_bias_layernorm(x, weight, bias):
    """Module-faithful path: LayerNorm over the last axis of x (..., C).

    Perf note: this path is lane-dense only when C % 128 == 0.  Restormer's
    channel counts (48/96/192) should be routed through
    `with_bias_layernorm_nchw` / `restormer_with_bias_layernorm` instead (the
    channel axis is not last there, so no HBM transpose is needed and stores
    stay lane-dense).  This path remains correct for any C.
    """
    target_block_bytes, vmem_limit = _chip_budget()
    orig_shape = x.shape
    C = orig_shape[-1]
    x2 = x.reshape(-1, C)                  # contiguity-preserving: no HBM copy
    N = x2.shape[0]
    itemsize = jnp.dtype(x.dtype).itemsize
    sub_mult = 16 if itemsize >= 2 else 32  # keep packed sub-32-bit rows whole

    tile_n = max(sub_mult, (target_block_bytes // (C * itemsize)) // sub_mult * sub_mult)
    if tile_n >= N:
        tile_n = N                         # block == full dim: any size allowed
    total_bytes = N * C * itemsize
    # Megacore: guarantee >=2 grid steps on tensors worth splitting (v7x).
    if pl.cdiv(N, tile_n) == 1 and total_bytes > _MIN_SPLIT_BYTES and N > sub_mult:
        tile_n = _round_up(pl.cdiv(N, 2), sub_mult)
    grid = (pl.cdiv(N, tile_n),)           # ragged last block: writes are masked

    w2 = weight.reshape(1, C)
    b2 = bias.reshape(1, C)

    out = pl.pallas_call(
        _ln_last_kernel,
        out_shape=jax.ShapeDtypeStruct((N, C), x.dtype),
        grid_spec=pltpu.PrefetchScalarGridSpec(
            num_scalar_prefetch=0,
            grid=grid,
            in_specs=[
                pl.BlockSpec((tile_n, C), lambda i: (i, 0)),
                pl.BlockSpec((1, C), lambda i: (0, 0)),
                pl.BlockSpec((1, C), lambda i: (0, 0)),
            ],
            out_specs=pl.BlockSpec((tile_n, C), lambda i: (i, 0)),
        ),
        compiler_params=pltpu.CompilerParams(
            dimension_semantics=("parallel",),
            vmem_limit_bytes=vmem_limit,
        ),
    )(x2, w2, b2)

    return out.reshape(orig_shape)


def with_bias_layernorm_nchw(x, weight, bias):
    """Lane-dense path: channel LayerNorm on an NCHW tensor (normalize axis 1).

    Numerically identical to to_3d(x) -> WithBias_LayerNorm -> to_4d in
    Restormer, but the spatial axis stays on the lane dimension so small
    channel counts (48/96/192) don't produce masked, lane-sparse stores, and
    no transpose passes are needed in the caller.
    """
    target_block_bytes, vmem_limit = _chip_budget()
    B, C, H, W = x.shape
    HW = H * W
    x3 = x.reshape(B, C, HW)               # contiguity-preserving: no HBM copy
    itemsize = jnp.dtype(x.dtype).itemsize

    lanes_target = max(128, target_block_bytes // (C * itemsize))
    if lanes_target >= HW:
        tile_hw = HW                       # full spatial extent (any size ok)
        tile_b = int(max(1, min(B, lanes_target // max(HW, 1))))
    else:
        tile_hw = max(128, (lanes_target // 128) * 128)    # multiple of 128
        tile_b = 1

    total_bytes = B * C * HW * itemsize
    # Megacore: guarantee >=2 grid steps on tensors worth splitting (v7x).
    if (pl.cdiv(B, tile_b) * pl.cdiv(HW, tile_hw) == 1
            and total_bytes > _MIN_SPLIT_BYTES):
        if B >= 2:
            tile_b = pl.cdiv(B, 2)
        elif HW >= 256:
            tile_hw = _round_up(pl.cdiv(HW, 2), 128)
    grid = (pl.cdiv(B, tile_b), pl.cdiv(HW, tile_hw))

    w2 = weight.reshape(C, 1)
    b2 = bias.reshape(C, 1)

    out = pl.pallas_call(
        _ln_channel_kernel,
        out_shape=jax.ShapeDtypeStruct((B, C, HW), x.dtype),
        grid_spec=pltpu.PrefetchScalarGridSpec(
            num_scalar_prefetch=0,
            grid=grid,
            in_specs=[
                pl.BlockSpec((tile_b, C, tile_hw), lambda bi, si: (bi, 0, si)),
                pl.BlockSpec((C, 1), lambda bi, si: (0, 0)),
                pl.BlockSpec((C, 1), lambda bi, si: (0, 0)),
            ],
            out_specs=pl.BlockSpec((tile_b, C, tile_hw), lambda bi, si: (bi, 0, si)),
        ),
        compiler_params=pltpu.CompilerParams(
            dimension_semantics=("parallel", "parallel"),
            vmem_limit_bytes=vmem_limit,
        ),
    )(x3, w2, b2)

    return out.reshape(B, C, H, W)


def restormer_with_bias_layernorm(x, weight, bias):
    """Dispatcher (review item 1): route Restormer's NCHW activations to the
    lane-dense channel kernel; anything else to the module-faithful last-axis
    kernel."""
    if x.ndim == 4 and x.shape[1] == weight.shape[-1]:
        return with_bias_layernorm_nchw(x, weight, bias)
    return with_bias_layernorm(x, weight, bias)


# ----------------------------------------------------------------------------
# References & demo
# ----------------------------------------------------------------------------

def _reference_last(x, weight, bias):
    mu = jnp.mean(x, axis=-1, keepdims=True)
    sigma = jnp.var(x, axis=-1, keepdims=True)   # population variance
    return (x - mu) / jnp.sqrt(sigma + _EPS) * weight + bias


def _reference_nchw(x, weight, bias):
    mu = jnp.mean(x, axis=1, keepdims=True)
    sigma = jnp.var(x, axis=1, keepdims=True)
    w = weight.reshape(1, -1, 1, 1)
    b = bias.reshape(1, -1, 1, 1)
    return (x - mu) / jnp.sqrt(sigma + _EPS) * w + b


if __name__ == "__main__":
    key = jax.random.PRNGKey(0)
    kx, kw, kb = jax.random.split(key, 3)

    # Restormer-style small shapes: B=2, C=48 channels (non-128-multiple), 16x16.
    B, C, H, W = 2, 48, 16, 16
    x_nchw = jax.random.normal(kx, (B, C, H, W), dtype=jnp.float32)
    weight = 1.0 + 0.05 * jax.random.normal(kw, (C,), dtype=jnp.float32)
    bias = 0.05 * jax.random.normal(kb, (C,), dtype=jnp.float32)

    # 1) Module-faithful path: (B, H*W, C), normalize over the last axis.
    x_3d = jnp.transpose(x_nchw, (0, 2, 3, 1)).reshape(B, H * W, C)
    out = jax.block_until_ready(with_bias_layernorm(x_3d, weight, bias))
    ref = _reference_last(x_3d, weight, bias)
    assert out.shape == x_3d.shape
    assert jnp.allclose(out, ref, atol=2e-5, rtol=2e-5), "channels-last mismatch"

    # 2) Odd row count (not a multiple of 16): per-row independence + masked writes.
    x_ragged = x_3d.reshape(-1, C)[:500]
    out_r = jax.block_until_ready(with_bias_layernorm(x_ragged, weight, bias))
    ref_r = _reference_last(x_ragged, weight, bias)
    assert jnp.allclose(out_r, ref_r, atol=2e-5, rtol=2e-5), "ragged mismatch"

    # 3) >2 MiB tensor with a non-dividing row count: exercises the megacore
    #    split (grid >= 2) and a genuinely ragged last block.
    kx2 = jax.random.fold_in(kx, 1)
    x_big = jax.random.normal(kx2, (11999, C), dtype=jnp.float32)
    out_b = jax.block_until_ready(with_bias_layernorm(x_big, weight, bias))
    ref_b = _reference_last(x_big, weight, bias)
    assert jnp.allclose(out_b, ref_b, atol=2e-5, rtol=2e-5), "split/ragged mismatch"

    # 4) Restormer dispatch: NCHW lane-dense channel norm (no to_3d/to_4d passes).
    out4 = jax.block_until_ready(restormer_with_bias_layernorm(x_nchw, weight, bias))
    ref4 = _reference_nchw(x_nchw, weight, bias)
    assert out4.shape == x_nchw.shape
    assert jnp.allclose(out4, ref4, atol=2e-5, rtol=2e-5), "nchw mismatch"

    print("KERNEL_OK")
</pallas_src>

<mosaic_0001>
module attributes {stable_mosaic.version = 11 : i64} {
  func.func @_ln_last_kernel(%arg0: i32, %arg1: memref<512x48xf32, #tpu.memory_space<vmem>>, %arg2: memref<1x48xf32, #tpu.memory_space<vmem>>, %arg3: memref<1x48xf32, #tpu.memory_space<vmem>>, %arg4: memref<512x48xf32, #tpu.memory_space<vmem>>) attributes {dimension_semantics = [#tpu.dimension_semantics<parallel>], iteration_bounds = array<i64: 1>, scalar_prefetch = 0 : i64, scratch_operands = 0 : i64, tpu.core_type = #tpu.core_type<tc>, window_params = [{transform_indices = @transform_0, window_bounds = array<i64: 512, 48>}, {pipeline_mode = #tpu.pipeline_mode<synchronous>, transform_indices = @transform_1, window_bounds = array<i64: 1, 48>}, {pipeline_mode = #tpu.pipeline_mode<synchronous>, transform_indices = @transform_2, window_bounds = array<i64: 1, 48>}, {transform_indices = @transform_3, window_bounds = array<i64: 512, 48>}]} {
    %c0 = arith.constant 0 : index
    %c0_0 = arith.constant 0 : index
    %0 = vector.load %arg1[%c0, %c0_0] : memref<512x48xf32, #tpu.memory_space<vmem>>, vector<512x48xf32>
    %cst = arith.constant dense<0.000000e+00> : vector<512xf32>
    %1 = vector.multi_reduction <add>, %0, %cst [1] : vector<512x48xf32> to vector<512xf32>
    %2 = vector.shape_cast %1 : vector<512xf32> to vector<512x1xf32>
    %cst_1 = arith.constant 4.800000e+01 : f32
    %3 = vector.broadcast %cst_1 : f32 to vector<512x1xf32>
    %4 = arith.divf %2, %3 : vector<512x1xf32>
    %5 = arith.mulf %0, %0 : vector<512x48xf32>
    %cst_2 = arith.constant dense<0.000000e+00> : vector<512xf32>
    %6 = vector.multi_reduction <add>, %5, %cst_2 [1] : vector<512x48xf32> to vector<512xf32>
    %7 = vector.shape_cast %6 : vector<512xf32> to vector<512x1xf32>
    %cst_3 = arith.constant 4.800000e+01 : f32
    %8 = vector.broadcast %cst_3 : f32 to vector<512x1xf32>
    %9 = arith.divf %7, %8 : vector<512x1xf32>
    %10 = arith.mulf %4, %4 : vector<512x1xf32>
    %11 = arith.subf %9, %10 : vector<512x1xf32>
    %cst_4 = arith.constant 0.000000e+00 : f32
    %12 = vector.broadcast %cst_4 : f32 to vector<512x1xf32>
    %13 = arith.maximumf %11, %12 : vector<512x1xf32>
    %cst_5 = arith.constant 9.99999974E-6 : f32
    %14 = vector.broadcast %cst_5 : f32 to vector<512x1xf32>
    %15 = arith.addf %13, %14 : vector<512x1xf32>
    %16 = math.rsqrt %15 : vector<512x1xf32>
    %c0_6 = arith.constant 0 : index
    %c0_7 = arith.constant 0 : index
    %17 = vector.load %arg2[%c0_6, %c0_7] : memref<1x48xf32, #tpu.memory_space<vmem>>, vector<1x48xf32>
    %c0_8 = arith.constant 0 : index
    %c0_9 = arith.constant 0 : index
    %18 = vector.load %arg3[%c0_8, %c0_9] : memref<1x48xf32, #tpu.memory_space<vmem>>, vector<1x48xf32>
    %19 = vector.broadcast %4 : vector<512x1xf32> to vector<512x48xf32>
    %20 = arith.subf %0, %19 : vector<512x48xf32>
    %21 = vector.broadcast %16 : vector<512x1xf32> to vector<512x48xf32>
    %22 = arith.mulf %20, %21 : vector<512x48xf32>
    %23 = vector.broadcast %17 : vector<1x48xf32> to vector<512x48xf32>
    %24 = arith.mulf %22, %23 : vector<512x48xf32>
    %25 = vector.broadcast %18 : vector<1x48xf32> to vector<512x48xf32>
    %26 = arith.addf %24, %25 : vector<512x48xf32>
    %c0_10 = arith.constant 0 : index
    %c0_11 = arith.constant 0 : index
    %27 = vector.load %arg4[%c0_10, %c0_11] : memref<512x48xf32, #tpu.memory_space<vmem>>, vector<512x48xf32>
    tpu.vector_store %arg4[%c0_10, %c0_11], %26 {strides = array<i32>} : memref<512x48xf32, #tpu.memory_space<vmem>>, vector<512x48xf32>,
    return
  }
  func.func @transform_0(%arg0: i32) -> (i32, i32) {
    %c0_i32 = arith.constant 0 : i32
    %c0_i32_0 = arith.constant 0 : i32
    return %arg0, %c0_i32 : i32, i32
  }
  func.func @transform_1(%arg0: i32) -> (i32, i32) {
    %c0_i32 = arith.constant 0 : i32
    %c0_i32_0 = arith.constant 0 : i32
    %c0_i32_1 = arith.constant 0 : i32
    return %c0_i32, %c0_i32_0 : i32, i32
  }
  func.func @transform_2(%arg0: i32) -> (i32, i32) {
    %c0_i32 = arith.constant 0 : i32
    %c0_i32_0 = arith.constant 0 : i32
    %c0_i32_1 = arith.constant 0 : i32
    return %c0_i32, %c0_i32_0 : i32, i32
  }
  func.func @transform_3(%arg0: i32) -> (i32, i32) {
    %c0_i32 = arith.constant 0 : i32
    %c0_i32_0 = arith.constant 0 : i32
    return %arg0, %c0_i32 : i32, i32
  }
}

</mosaic_0001>

<llo_original>
// kernel: tpu_custom_call.1
$region0: #{tpu_custom_call.1}
  #allocation0 [shape = 'u32[]', space=smem, size = 0x4, offset = 0x4, fixed_abs, tag = 'smem constant byte address 0x4 - core index']
  #allocation1 [shape = 'u32[144,128]{1,0:T(1,128)}', space=vmem, size = 0x12000, scoped, tag = 'internal scratch']
  %s0 = inlined_call_operand.vmem [shape: f32[512,48], index: 0, kind: input, shape index: {}]
  %s1 = inlined_call_operand.vmem [shape: f32[1,48], index: 1, kind: input, shape index: {}]
  %s2 = inlined_call_operand.vmem [shape: f32[1,48], index: 2, kind: input, shape index: {}]
  %s3 = inlined_call_operand.vmem [shape: f32[512,48], index: 3, kind: output, shape index: {}]
  %s4 = sld [smem:[#allocation0]]
  $region22: #{tpu_custom_call.1} parent=0
    _
  %s6 = ssub.s32 1, %s4
  %s7 = scalar_select 0, %s6, %s4
  // Predicated region
  $region2: #{tpu_custom_call.1} parent=0 // pred_check
    _
  $region3: #{tpu_custom_call.1} parent=0 // pred_check_branch
    %9 = sbr.rel (0) target = $region5
  $region4: #{tpu_custom_call.1} parent=0 // pred_region
    _
  $region5: #{tpu_custom_call.1} parent=0 // pred_fallthru
    _
  // Predicated region
  $region6: #{tpu_custom_call.1} parent=0 // pred_check
    _
  $region7: #{tpu_custom_call.1} parent=0 // pred_check_branch
    %11 = sbr.rel (0) target = $region9
  $region8: #{tpu_custom_call.1} parent=0 // pred_region
    _
  $region9: #{tpu_custom_call.1} parent=0 // pred_fallthru
    _
  // Predicated region
  $region10: #{tpu_custom_call.1} parent=0 // pred_check
    _
  $region11: #{tpu_custom_call.1} parent=0 // pred_check_branch
    %13 = sbr.rel (0) target = $region13
  $region12: #{tpu_custom_call.1} parent=0 // pred_region
    _
  $region13: #{tpu_custom_call.1} parent=0 // pred_fallthru
    _
  %v14 = vld [vmem:[%s0] sm:$0xff]
  %v15 = vld [vmem:[%s0 + $0x8] sm:$0xff]
  %v16 = vld [vmem:[%s0 + $0x10] sm:$0xff]
  %v17 = vld [vmem:[%s0 + $0x18] sm:$0xff]
  %v18 = vld [vmem:[%s0 + $0x20] sm:$0xff]
  %v19 = vld [vmem:[%s0 + $0x28] sm:$0xff]
  %v20 = vld [vmem:[%s0 + $0x30] sm:$0xff]
  %v21 = vld [vmem:[%s0 + $0x38] sm:$0xff]
  %v22 = vld [vmem:[%s0 + $0x40] sm:$0xff]
  %v23 = vld [vmem:[%s0 + $0x48] sm:$0xff]
  %v24 = vld [vmem:[%s0 + $0x50] sm:$0xff]
  %v25 = vld [vmem:[%s0 + $0x58] sm:$0xff]
  %v26 = vld [vmem:[%s0 + $0x60] sm:$0xff]
  %v27 = vld [vmem:[%s0 + $0x68] sm:$0xff]
  %v28 = vld [vmem:[%s0 + $0x70] sm:$0xff]
  %v29 = vld [vmem:[%s0 + $0x78] sm:$0xff]
  %v30 = vld [vmem:[%s0 + $0x80] sm:$0xff]
  %v31 = vld [vmem:[%s0 + $0x88] sm:$0xff]
  %v32 = vld [vmem:[%s0 + $0x90] sm:$0xff]
  %v33 = vld [vmem:[%s0 + $0x98] sm:$0xff]
  %v34 = vld [vmem:[%s0 + $0xa0] sm:$0xff]
  %v35 = vld [vmem:[%s0 + $0xa8] sm:$0xff]
  %v36 = vld [vmem:[%s0 + $0xb0] sm:$0xff]
  %v37 = vld [vmem:[%s0 + $0xb8] sm:$0xff]
  %v38 = vld [vmem:[%s0 + $0xc0] sm:$0xff]
  %v39 = vld [vmem:[%s0 + $0xc8] sm:$0xff]
  %v40 = vld [vmem:[%s0 + $0xd0] sm:$0xff]
  %v41 = vld [vmem:[%s0 + $0xd8] sm:$0xff]
  %v42 = vld [vmem:[%s0 + $0xe0] sm:$0xff]
  %v43 = vld [vmem:[%s0 + $0xe8] sm:$0xff]
  %v44 = vld [vmem:[%s0 + $0xf0] sm:$0xff]
  %v45 = vld [vmem:[%s0 + $0xf8] sm:$0xff]
  %v46 = vld [vmem:[%s0 + $0x100] sm:$0xff]
  %v47 = vld [vmem:[%s0 + $0x108] sm:$0xff]
  %v48 = vld [vmem:[%s0 + $0x110] sm:$0xff]
  %v49 = vld [vmem:[%s0 + $0x118] sm:$0xff]
  %v50 = vld [vmem:[%s0 + $0x120] sm:$0xff]
  %v51 = vld [vmem:[%s0 + $0x128] sm:$0xff]
  %v52 = vld [vmem:[%s0 + $0x130] sm:$0xff]
  %v53 = vld [vmem:[%s0 + $0x138] sm:$0xff]
  %v54 = vld [vmem:[%s0 + $0x140] sm:$0xff]
  %v55 = vld [vmem:[%s0 + $0x148] sm:$0xff]
  %v56 = vld [vmem:[%s0 + $0x150] sm:$0xff]
  %v57 = vld [vmem:[%s0 + $0x158] sm:$0xff]
  %v58 = vld [vmem:[%s0 + $0x160] sm:$0xff]
  %v59 = vld [vmem:[%s0 + $0x168] sm:$0xff]
  %v60 = vld [vmem:[%s0 + $0x170] sm:$0xff]
  %v61 = vld [vmem:[%s0 + $0x178] sm:$0xff]
  %v62 = vld [vmem:[%s0 + $0x180] sm:$0xff]
  %v63 = vld [vmem:[%s0 + $0x188] sm:$0xff]
  %v64 = vld [vmem:[%s0 + $0x190] sm:$0xff]
  %v65 = vld [vmem:[%s0 + $0x198] sm:$0xff]
  %v66 = vld [vmem:[%s0 + $0x1a0] sm:$0xff]
  %v67 = vld [vmem:[%s0 + $0x1a8] sm:$0xff]
  %v68 = vld [vmem:[%s0 + $0x1b0] sm:$0xff]
  %v69 = vld [vmem:[%s0 + $0x1b8] sm:$0xff]
  %v70 = vld [vmem:[%s0 + $0x1c0] sm:$0xff]
  %v71 = vld [vmem:[%s0 + $0x1c8] sm:$0xff]
  %v72 = vld [vmem:[%s0 + $0x1d0] sm:$0xff]
  %v73 = vld [vmem:[%s0 + $0x1d8] sm:$0xff]
  %v74 = vld [vmem:[%s0 + $0x1e0] sm:$0xff]
  %v75 = vld [vmem:[%s0 + $0x1e8] sm:$0xff]
  %v76 = vld [vmem:[%s0 + $0x1f0] sm:$0xff]
  %v77 = vld [vmem:[%s0 + $0x1f8] sm:$0xff]
  %vm78 = vcmask 392192
  %v79 = vsel %vm78, %v14, 0.0
  %80 = vadd.xlane.f32.xlu0 %v79
  %v81 = vpop.xlane.xlu0 %80
  %v82 = vsel %vm78, %v15, 0.0
  %83 = vadd.xlane.f32.xlu0 %v82
  %v84 = vpop.xlane.xlu0 %83
  %v85 = vsel %vm78, %v16, 0.0
  %86 = vadd.xlane.f32.xlu0 %v85
  %v87 = vpop.xlane.xlu0 %86
  %v88 = vsel %vm78, %v17, 0.0
  %89 = vadd.xlane.f32.xlu0 %v88
  %v90 = vpop.xlane.xlu0 %89
  %v91 = vsel %vm78, %v18, 0.0
  %92 = vadd.xlane.f32.xlu0 %v91
  %v93 = vpop.xlane.xlu0 %92
  %v94 = vsel %vm78, %v19, 0.0
  %95 = vadd.xlane.f32.xlu0 %v94
  %v96 = vpop.xlane.xlu0 %95
  %v97 = vsel %vm78, %v20, 0.0
  %98 = vadd.xlane.f32.xlu0 %v97
  %v99 = vpop.xlane.xlu0 %98
  %v100 = vsel %vm78, %v21, 0.0
  %101 = vadd.xlane.f32.xlu0 %v100
  %v102 = vpop.xlane.xlu0 %101
  %v103 = vsel %vm78, %v22, 0.0
  %104 = vadd.xlane.f32.xlu0 %v103
  %v105 = vpop.xlane.xlu0 %104
  %v106 = vsel %vm78, %v23, 0.0
  %107 = vadd.xlane.f32.xlu0 %v106
  %v108 = vpop.xlane.xlu0 %107
  %v109 = vsel %vm78, %v24, 0.0
  %110 = vadd.xlane.f32.xlu0 %v109
  %v111 = vpop.xlane.xlu0 %110
  %v112 = vsel %vm78, %v25, 0.0
  %113 = vadd.xlane.f32.xlu0 %v112
  %v114 = vpop.xlane.xlu0 %113
  %v115 = vsel %vm78, %v26, 0.0
  %116 = vadd.xlane.f32.xlu0 %v115
  %v117 = vpop.xlane.xlu0 %116
  %v118 = vsel %vm78, %v27, 0.0
  %119 = vadd.xlane.f32.xlu0 %v118
  %v120 = vpop.xlane.xlu0 %119
  %v121 = vsel %vm78, %v28, 0.0
  %122 = vadd.xlane.f32.xlu0 %v121
  %v123 = vpop.xlane.xlu0 %122
  %v124 = vsel %vm78, %v29, 0.0
  %125 = vadd.xlane.f32.xlu0 %v124
  %v126 = vpop.xlane.xlu0 %125
  %v127 = vsel %vm78, %v30, 0.0
  %128 = vadd.xlane.f32.xlu0 %v127
  %v129 = vpop.xlane.xlu0 %128
  %v130 = vsel %vm78, %v31, 0.0
  %131 = vadd.xlane.f32.xlu0 %v130
  %v132 = vpop.xlane.xlu0 %131
  %v133 = vsel %vm78, %v32, 0.0
  %134 = vadd.xlane.f32.xlu0 %v133
  %v135 = vpop.xlane.xlu0 %134
  %v136 = vsel %vm78, %v33, 0.0
  %137 = vadd.xlane.f32.xlu0 %v136
  %v138 = vpop.xlane.xlu0 %137
  %v139 = vsel %vm78, %v34, 0.0
  %140 = vadd.xlane.f32.xlu0 %v139
  %v141 = vpop.xlane.xlu0 %140
  %v142 = vsel %vm78, %v35, 0.0
  %143 = vadd.xlane.f32.xlu0 %v142
  %v144 = vpop.xlane.xlu0 %143
  %v145 = vsel %vm78, %v36, 0.0
  %146 = vadd.xlane.f32.xlu0 %v145
  %v147 = vpop.xlane.xlu0 %146
  %v148 = vsel %vm78, %v37, 0.0
  %149 = vadd.xlane.f32.xlu0 %v148
  %v150 = vpop.xlane.xlu0 %149
  %v151 = vsel %vm78, %v38, 0.0
  %152 = vadd.xlane.f32.xlu0 %v151
  %v153 = vpop.xlane.xlu0 %152
  %v154 = vsel %vm78, %v39, 0.0
  %155 = vadd.xlane.f32.xlu0 %v154
  %v156 = vpop.xlane.xlu0 %155
  %v157 = vsel %vm78, %v40, 0.0
  %158 = vadd.xlane.f32.xlu0 %v157
  %v159 = vpop.xlane.xlu0 %158
  %v160 = vsel %vm78, %v41, 0.0
  %161 = vadd.xlane.f32.xlu0 %v160
  %v162 = vpop.xlane.xlu0 %161
  %v163 = vsel %vm78, %v42, 0.0
  %164 = vadd.xlane.f32.xlu0 %v163
  %v165 = vpop.xlane.xlu0 %164
  %v166 = vsel %vm78, %v43, 0.0
  %167 = vadd.xlane.f32.xlu0 %v166
  %v168 = vpop.xlane.xlu0 %167
  %v169 = vsel %vm78, %v44, 0.0
  %170 = vadd.xlane.f32.xlu0 %v169
  %v171 = vpop.xlane.xlu0 %170
  %v172 = vsel %vm78, %v45, 0.0
  %173 = vadd.xlane.f32.xlu0 %v172
  %v174 = vpop.xlane.xlu0 %173
  %v175 = vsel %vm78, %v46, 0.0
  %176 = vadd.xlane.f32.xlu0 %v175
  %v177 = vpop.xlane.xlu0 %176
  %v178 = vsel %vm78, %v47, 0.0
  %179 = vadd.xlane.f32.xlu0 %v178
  %v180 = vpop.xlane.xlu0 %179
  %v181 = vsel %vm78, %v48, 0.0
  %182 = vadd.xlane.f32.xlu0 %v181
  %v183 = vpop.xlane.xlu0 %182
  %v184 = vsel %vm78, %v49, 0.0
  %185 = vadd.xlane.f32.xlu0 %v184
  %v186 = vpop.xlane.xlu0 %185
  %v187 = vsel %vm78, %v50, 0.0
  %188 = vadd.xlane.f32.xlu0 %v187
  %v189 = vpop.xlane.xlu0 %188
  %v190 = vsel %vm78, %v51, 0.0
  %191 = vadd.xlane.f32.xlu0 %v190
  %v192 = vpop.xlane.xlu0 %191
  %v193 = vsel %vm78, %v52, 0.0
  %194 = vadd.xlane.f32.xlu0 %v193
  %v195 = vpop.xlane.xlu0 %194
  %v196 = vsel %vm78, %v53, 0.0
  %197 = vadd.xlane.f32.xlu0 %v196
  %v198 = vpop.xlane.xlu0 %197
  %v199 = vsel %vm78, %v54, 0.0
  %200 = vadd.xlane.f32.xlu0 %v199
  %v201 = vpop.xlane.xlu0 %200
  %v202 = vsel %vm78, %v55, 0.0
  %203 = vadd.xlane.f32.xlu0 %v202
  %v204 = vpop.xlane.xlu0 %203
  %v205 = vsel %vm78, %v56, 0.0
  %206 = vadd.xlane.f32.xlu0 %v205
  %v207 = vpop.xlane.xlu0 %206
  %v208 = vsel %vm78, %v57, 0.0
  %209 = vadd.xlane.f32.xlu0 %v208
  %v210 = vpop.xlane.xlu0 %209
  %v211 = vsel %vm78, %v58, 0.0
  %212 = vadd.xlane.f32.xlu0 %v211
  %v213 = vpop.xlane.xlu0 %212
  %v214 = vsel %vm78, %v59, 0.0
  %215 = vadd.xlane.f32.xlu0 %v214
  %v216 = vpop.xlane.xlu0 %215
  %v217 = vsel %vm78, %v60, 0.0
  %218 = vadd.xlane.f32.xlu0 %v217
  %v219 = vpop.xlane.xlu0 %218
  %v220 = vsel %vm78, %v61, 0.0
  %221 = vadd.xlane.f32.xlu0 %v220
  %v222 = vpop.xlane.xlu0 %221
  %v223 = vsel %vm78, %v62, 0.0
  %224 = vadd.xlane.f32.xlu0 %v223
  %v225 = vpop.xlane.xlu0 %224
  %v226 = vsel %vm78, %v63, 0.0
  %227 = vadd.xlane.f32.xlu0 %v226
  %v228 = vpop.xlane.xlu0 %227
  %v229 = vsel %vm78, %v64, 0.0
  %230 = vadd.xlane.f32.xlu0 %v229
  %v231 = vpop.xlane.xlu0 %230
  %v232 = vsel %vm78, %v65, 0.0
  %233 = vadd.xlane.f32.xlu0 %v232
  %v234 = vpop.xlane.xlu0 %233
  %v235 = vsel %vm78, %v66, 0.0
  %236 = vadd.xlane.f32.xlu0 %v235
  %v237 = vpop.xlane.xlu0 %236
  %v238 = vsel %vm78, %v67, 0.0
  %239 = vadd.xlane.f32.xlu0 %v238
  %v240 = vpop.xlane.xlu0 %239
  %v241 = vsel %vm78, %v68, 0.0
  %242 = vadd.xlane.f32.xlu0 %v241
  %v243 = vpop.xlane.xlu0 %242
  %v244 = vsel %vm78, %v69, 0.0
  %245 = vadd.xlane.f32.xlu0 %v244
  %v246 = vpop.xlane.xlu0 %245
  %v247 = vsel %vm78, %v70, 0.0
  %248 = vadd.xlane.f32.xlu0 %v247
  %v249 = vpop.xlane.xlu0 %248
  %v250 = vsel %vm78, %v71, 0.0
  %251 = vadd.xlane.f32.xlu0 %v250
  %v252 = vpop.xlane.xlu0 %251
  %v253 = vsel %vm78, %v72, 0.0
  %254 = vadd.xlane.f32.xlu0 %v253
  %v255 = vpop.xlane.xlu0 %254
  %v256 = vsel %vm78, %v73, 0.0
  %257 = vadd.xlane.f32.xlu0 %v256
  %v258 = vpop.xlane.xlu0 %257
  %v259 = vsel %vm78, %v74, 0.0
  %260 = vadd.xlane.f32.xlu0 %v259
  %v261 = vpop.xlane.xlu0 %260
  %v262 = vsel %vm78, %v75, 0.0
  %263 = vadd.xlane.f32.xlu0 %v262
  %v264 = vpop.xlane.xlu0 %263
  %v265 = vsel %vm78, %v76, 0.0
  %266 = vadd.xlane.f32.xlu0 %v265
  %v267 = vpop.xlane.xlu0 %266
  %v268 = vsel %vm78, %v77, 0.0
  %269 = vadd.xlane.f32.xlu0 %v268
  %v270 = vpop.xlane.xlu0 %269
  %v271 = vrcp.pop 48.0
  %v272 = vmul.f32 %v81, %v271
  %v273 = vmul.f32 %v84, %v271
  %v274 = vmul.f32 %v87, %v271
  %v275 = vmul.f32 %v90, %v271
  %v276 = vmul.f32 %v93, %v271
  %v277 = vmul.f32 %v96, %v271
  %v278 = vmul.f32 %v99, %v271
  %v279 = vmul.f32 %v102, %v271
  %v280 = vmul.f32 %v105, %v271
  %v281 = vmul.f32 %v108, %v271
  %v282 = vmul.f32 %v111, %v271
  %v283 = vmul.f32 %v114, %v271
  %v284 = vmul.f32 %v117, %v271
  %v285 = vmul.f32 %v120, %v271
  %v286 = vmul.f32 %v123, %v271
  %v287 = vmul.f32 %v126, %v271
  %v288 = vmul.f32 %v129, %v271
  %v289 = vmul.f32 %v132, %v271
  %v290 = vmul.f32 %v135, %v271
  %v291 = vmul.f32 %v138, %v271
  %v292 = vmul.f32 %v141, %v271
  %v293 = vmul.f32 %v144, %v271
  %v294 = vmul.f32 %v147, %v271
  %v295 = vmul.f32 %v150, %v271
  %v296 = vmul.f32 %v153, %v271
  %v297 = vmul.f32 %v156, %v271
  %v298 = vmul.f32 %v159, %v271
  %v299 = vmul.f32 %v162, %v271
  %v300 = vmul.f32 %v165, %v271
  %v301 = vmul.f32 %v168, %v271
  %v302 = vmul.f32 %v171, %v271
  %v303 = vmul.f32 %v174, %v271
  %v304 = vmul.f32 %v177, %v271
  %v305 = vmul.f32 %v180, %v271
  %v306 = vmul.f32 %v183, %v271
  %v307 = vmul.f32 %v186, %v271
  %v308 = vmul.f32 %v189, %v271
  %v309 = vmul.f32 %v192, %v271
  %v310 = vmul.f32 %v195, %v271
  %v311 = vmul.f32 %v198, %v271
  %v312 = vmul.f32 %v201, %v271
  %v313 = vmul.f32 %v204, %v271
  %v314 = vmul.f32 %v207, %v271
  %v315 = vmul.f32 %v210, %v271
  %v316 = vmul.f32 %v213, %v271
  %v317 = vmul.f32 %v216, %v271
  %v318 = vmul.f32 %v219, %v271
  %v319 = vmul.f32 %v222, %v271
  %v320 = vmul.f32 %v225, %v271
  %v321 = vmul.f32 %v228, %v271
  %v322 = vmul.f32 %v231, %v271
  %v323 = vmul.f32 %v234, %v271
  %v324 = vmul.f32 %v237, %v271
  %v325 = vmul.f32 %v240, %v271
  %v326 = vmul.f32 %v243, %v271
  %v327 = vmul.f32 %v246, %v271
  %v328 = vmul.f32 %v249, %v271
  %v329 = vmul.f32 %v252, %v271
  %v330 = vmul.f32 %v255, %v271
  %v331 = vmul.f32 %v258, %v271
  %v332 = vmul.f32 %v261, %v271
  %v333 = vmul.f32 %v264, %v271
  %v334 = vmul.f32 %v267, %v271
  %v335 = vmul.f32 %v270, %v271
  %v336 = vmul.f32 %v14, %v14
  %v337 = vmul.f32 %v15, %v15
  %v338 = vmul.f32 %v16, %v16
  %v339 = vmul.f32 %v17, %v17
  %v340 = vmul.f32 %v18, %v18
  %v341 = vmul.f32 %v19, %v19
  %v342 = vmul.f32 %v20, %v20
  %v343 = vmul.f32 %v21, %v21
  %v344 = vmul.f32 %v22, %v22
  %v345 = vmul.f32 %v23, %v23
  %v346 = vmul.f32 %v24, %v24
  %v347 = vmul.f32 %v25, %v25
  %v348 = vmul.f32 %v26, %v26
  %v349 = vmul.f32 %v27, %v27
  %v350 = vmul.f32 %v28, %v28
  %v351 = vmul.f32 %v29, %v29
  %v352 = vmul.f32 %v30, %v30
  %v353 = vmul.f32 %v31, %v31
  %v354 = vmul.f32 %v32, %v32
  %v355 = vmul.f32 %v33, %v33
  %v356 = vmul.f32 %v34, %v34
  %v357 = vmul.f32 %v35, %v35
  %v358 = vmul.f32 %v36, %v36
  %v359 = vmul.f32 %v37, %v37
  %v360 = vmul.f32 %v38, %v38
  %v361 = vmul.f32 %v39, %v39
  %v362 = vmul.f32 %v40, %v40
  %v363 = vmul.f32 %v41, %v41
  %v364 = vmul.f32 %v42, %v42
  %v365 = vmul.f32 %v43, %v43
  %v366 = vmul.f32 %v44, %v44
  %v367 = vmul.f32 %v45, %v45
  %v368 = vmul.f32 %v46, %v46
  %v369 = vmul.f32 %v47, %v47
  %v370 = vmul.f32 %v48, %v48
  %v371 = vmul.f32 %v49, %v49
  %v372 = vmul.f32 %v50, %v50
  %v373 = vmul.f32 %v51, %v51
  %v374 = vmul.f32 %v52, %v52
  %v375 = vmul.f32 %v53, %v53
  %v376 = vmul.f32 %v54, %v54
  %v377 = vmul.f32 %v55, %v55
  %v378 = vmul.f32 %v56, %v56
  %v379 = vmul.f32 %v57, %v57
  %v380 = vmul.f32 %v58, %v58
  %v381 = vmul.f32 %v59, %v59
  %v382 = vmul.f32 %v60, %v60
  %v383 = vmul.f32 %v61, %v61
  %v384 = vmul.f32 %v62, %v62
  %v385 = vmul.f32 %v63, %v63
  %v386 = vmul.f32 %v64, %v64
  %v387 = vmul.f32 %v65, %v65
  %v388 = vmul.f32 %v66, %v66
  %v389 = vmul.f32 %v67, %v67
  %v390 = vmul.f32 %v68, %v68
  %v391 = vmul.f32 %v69, %v69
  %v392 = vmul.f32 %v70, %v70
  %v393 = vmul.f32 %v71, %v71
  %v394 = vmul.f32 %v72, %v72
  %v395 = vmul.f32 %v73, %v73
  %v396 = vmul.f32 %v74, %v74
  %v397 = vmul.f32 %v75, %v75
  %v398 = vmul.f32 %v76, %v76
  %v399 = vmul.f32 %v77, %v77
  %v400 = vsel %vm78, %v336, 0.0
  %401 = vadd.xlane.f32.xlu0 %v400
  %v402 = vpop.xlane.xlu0 %401
  %v403 = vsel %vm78, %v337, 0.0
  %404 = vadd.xlane.f32.xlu0 %v403
  %v405 = vpop.xlane.xlu0 %404
  %v406 = vsel %vm78, %v338, 0.0
  %407 = vadd.xlane.f32.xlu0 %v406
  %v408 = vpop.xlane.xlu0 %407
  %v409 = vsel %vm78, %v339, 0.0
  %410 = vadd.xlane.f32.xlu0 %v409
  %v411 = vpop.xlane.xlu0 %410
  %v412 = vsel %vm78, %v340, 0.0
  %413 = vadd.xlane.f32.xlu0 %v412
  %v414 = vpop.xlane.xlu0 %413
  %v415 = vsel %vm78, %v341, 0.0
  %416 = vadd.xlane.f32.xlu0 %v415
  %v417 = vpop.xlane.xlu0 %416
  %v418 = vsel %vm78, %v342, 0.0
  %419 = vadd.xlane.f32.xlu0 %v418
  %v420 = vpop.xlane.xlu0 %419
  %v421 = vsel %vm78, %v343, 0.0
  %422 = vadd.xlane.f32.xlu0 %v421
  %v423 = vpop.xlane.xlu0 %422
  %v424 = vsel %vm78, %v344, 0.0
  %425 = vadd.xlane.f32.xlu0 %v424
  %v426 = vpop.xlane.xlu0 %425
  %v427 = vsel %vm78, %v345, 0.0
  %428 = vadd.xlane.f32.xlu0 %v427
  %v429 = vpop.xlane.xlu0 %428
  %v430 = vsel %vm78, %v346, 0.0
  %431 = vadd.xlane.f32.xlu0 %v430
  %v432 = vpop.xlane.xlu0 %431
  %v433 = vsel %vm78, %v347, 0.0
  %434 = vadd.xlane.f32.xlu0 %v433
  %v435 = vpop.xlane.xlu0 %434
  %v436 = vsel %vm78, %v348, 0.0
  %437 = vadd.xlane.f32.xlu0 %v436
  %v438 = vpop.xlane.xlu0 %437
  %v439 = vsel %vm78, %v349, 0.0
  %440 = vadd.xlane.f32.xlu0 %v439
  %v441 = vpop.xlane.xlu0 %440
  %v442 = vsel %vm78, %v350, 0.0
  %443 = vadd.xlane.f32.xlu0 %v442
  %v444 = vpop.xlane.xlu0 %443
  %v445 = vsel %vm78, %v351, 0.0
  %446 = vadd.xlane.f32.xlu0 %v445
  %v447 = vpop.xlane.xlu0 %446
  %v448 = vsel %vm78, %v352, 0.0
  %449 = vadd.xlane.f32.xlu0 %v448
  %v450 = vpop.xlane.xlu0 %449
  %v451 = vsel %vm78, %v353, 0.0
  %452 = vadd.xlane.f32.xlu0 %v451
  %v453 = vpop.xlane.xlu0 %452
  %v454 = vsel %vm78, %v354, 0.0
  %455 = vadd.xlane.f32.xlu0 %v454
  %v456 = vpop.xlane.xlu0 %455
  %v457 = vsel %vm78, %v355, 0.0
  %458 = vadd.xlane.f32.xlu0 %v457
  %v459 = vpop.xlane.xlu0 %458
  %v460 = vsel %vm78, %v356, 0.0
  %461 = vadd.xlane.f32.xlu0 %v460
  %v462 = vpop.xlane.xlu0 %461
  %v463 = vsel %vm78, %v357, 0.0
  %464 = vadd.xlane.f32.xlu0 %v463
  %v465 = vpop.xlane.xlu0 %464
  %v466 = vsel %vm78, %v358, 0.0
  %467 = vadd.xlane.f32.xlu0 %v466
  %v468 = vpop.xlane.xlu0 %467
  %v469 = vsel %vm78, %v359, 0.0
  %470 = vadd.xlane.f32.xlu0 %v469
  %v471 = vpop.xlane.xlu0 %470
  %v472 = vsel %vm78, %v360, 0.0
  %473 = vadd.xlane.f32.xlu0 %v472
  %v474 = vpop.xlane.xlu0 %473
  %v475 = vsel %vm78, %v361, 0.0
  %476 = vadd.xlane.f32.xlu0 %v475
  %v477 = vpop.xlane.xlu0 %476
  %v478 = vsel %vm78, %v362, 0.0
  %479 = vadd.xlane.f32.xlu0 %v478
  %v480 = vpop.xlane.xlu0 %479
  %v481 = vsel %vm78, %v363, 0.0
  %482 = vadd.xlane.f32.xlu0 %v481
  %v483 = vpop.xlane.xlu0 %482
  %v484 = vsel %vm78, %v364, 0.0
  %485 = vadd.xlane.f32.xlu0 %v484
  %v486 = vpop.xlane.xlu0 %485
  %v487 = vsel %vm78, %v365, 0.0
  %488 = vadd.xlane.f32.xlu0 %v487
  %v489 = vpop.xlane.xlu0 %488
  %v490 = vsel %vm78, %v366, 0.0
  %491 = vadd.xlane.f32.xlu0 %v490
  %v492 = vpop.xlane.xlu0 %491
  %v493 = vsel %vm78, %v367, 0.0
  %494 = vadd.xlane.f32.xlu0 %v493
  %v495 = vpop.xlane.xlu0 %494
  %v496 = vsel %vm78, %v368, 0.0
  %497 = vadd.xlane.f32.xlu0 %v496
  %v498 = vpop.xlane.xlu0 %497
  %v499 = vsel %vm78, %v369, 0.0
  %500 = vadd.xlane.f32.xlu0 %v499
  %v501 = vpop.xlane.xlu0 %500
  %v502 = vsel %vm78, %v370, 0.0
  %503 = vadd.xlane.f32.xlu0 %v502
  %v504 = vpop.xlane.xlu0 %503
  %v505 = vsel %vm78, %v371, 0.0
  %506 = vadd.xlane.f32.xlu0 %v505
  %v507 = vpop.xlane.xlu0 %506
  %v508 = vsel %vm78, %v372, 0.0
  %509 = vadd.xlane.f32.xlu0 %v508
  %v510 = vpop.xlane.xlu0 %509
  %v511 = vsel %vm78, %v373, 0.0
  %512 = vadd.xlane.f32.xlu0 %v511
  %v513 = vpop.xlane.xlu0 %512
  %v514 = vsel %vm78, %v374, 0.0
  %515 = vadd.xlane.f32.xlu0 %v514
  %v516 = vpop.xlane.xlu0 %515
  %v517 = vsel %vm78, %v375, 0.0
  %518 = vadd.xlane.f32.xlu0 %v517
  %v519 = vpop.xlane.xlu0 %518
  %v520 = vsel %vm78, %v376, 0.0
  %521 = vadd.xlane.f32.xlu0 %v520
  %v522 = vpop.xlane.xlu0 %521
  %v523 = vsel %vm78, %v377, 0.0
  %524 = vadd.xlane.f32.xlu0 %v523
  %v525 = vpop.xlane.xlu0 %524
  %v526 = vsel %vm78, %v378, 0.0
  %527 = vadd.xlane.f32.xlu0 %v526
  %v528 = vpop.xlane.xlu0 %527
  %v529 = vsel %vm78, %v379, 0.0
  %530 = vadd.xlane.f32.xlu0 %v529
  %v531 = vpop.xlane.xlu0 %530
  %v532 = vsel %vm78, %v380, 0.0
  %533 = vadd.xlane.f32.xlu0 %v532
  %v534 = vpop.xlane.xlu0 %533
  %v535 = vsel %vm78, %v381, 0.0
  %536 = vadd.xlane.f32.xlu0 %v535
  %v537 = vpop.xlane.xlu0 %536
  %v538 = vsel %vm78, %v382, 0.0
  %539 = vadd.xlane.f32.xlu0 %v538
  %v540 = vpop.xlane.xlu0 %539
  %v541 = vsel %vm78, %v383, 0.0
  %542 = vadd.xlane.f32.xlu0 %v541
  %v543 = vpop.xlane.xlu0 %542
  %v544 = vsel %vm78, %v384, 0.0
  %545 = vadd.xlane.f32.xlu0 %v544
  %v546 = vpop.xlane.xlu0 %545
  %v547 = vsel %vm78, %v385, 0.0
  %548 = vadd.xlane.f32.xlu0 %v547
  %v549 = vpop.xlane.xlu0 %548
  %v550 = vsel %vm78, %v386, 0.0
  %551 = vadd.xlane.f32.xlu0 %v550
  %v552 = vpop.xlane.xlu0 %551
  %v553 = vsel %vm78, %v387, 0.0
  %554 = vadd.xlane.f32.xlu0 %v553
  %v555 = vpop.xlane.xlu0 %554
  %v556 = vsel %vm78, %v388, 0.0
  %557 = vadd.xlane.f32.xlu0 %v556
  %v558 = vpop.xlane.xlu0 %557
  %v559 = vsel %vm78, %v389, 0.0
  %560 = vadd.xlane.f32.xlu0 %v559
  %v561 = vpop.xlane.xlu0 %560
  %v562 = vsel %vm78, %v390, 0.0
  %563 = vadd.xlane.f32.xlu0 %v562
  %v564 = vpop.xlane.xlu0 %563
  %v565 = vsel %vm78, %v391, 0.0
  %566 = vadd.xlane.f32.xlu0 %v565
  %v567 = vpop.xlane.xlu0 %566
  %v568 = vsel %vm78, %v392, 0.0
  %569 = vadd.xlane.f32.xlu0 %v568
  %v570 = vpop.xlane.xlu0 %569
  %v571 = vsel %vm78, %v393, 0.0
  %572 = vadd.xlane.f32.xlu0 %v571
  %v573 = vpop.xlane.xlu0 %572
  %v574 = vsel %vm78, %v394, 0.0
  %575 = vadd.xlane.f32.xlu0 %v574
  %v576 = vpop.xlane.xlu0 %575
  %v577 = vsel %vm78, %v395, 0.0
  %578 = vadd.xlane.f32.xlu0 %v577
  %v579 = vpop.xlane.xlu0 %578
  %v580 = vsel %vm78, %v396, 0.0
  %581 = vadd.xlane.f32.xlu0 %v580
  %v582 = vpop.xlane.xlu0 %581
  %v583 = vsel %vm78, %v397, 0.0
  %584 = vadd.xlane.f32.xlu0 %v583
  %v585 = vpop.xlane.xlu0 %584
  %v586 = vsel %vm78, %v398, 0.0
  %587 = vadd.xlane.f32.xlu0 %v586
  %v588 = vpop.xlane.xlu0 %587
  %v589 = vsel %vm78, %v399, 0.0
  %590 = vadd.xlane.f32.xlu0 %v589
  %v591 = vpop.xlane.xlu0 %590
  %v592 = vmul.f32 %v402, %v271
  %v593 = vmul.f32 %v405, %v271
  %v594 = vmul.f32 %v408, %v271
  %v595 = vmul.f32 %v411, %v271
  %v596 = vmul.f32 %v414, %v271
  %v597 = vmul.f32 %v417, %v271
  %v598 = vmul.f32 %v420, %v271
  %v599 = vmul.f32 %v423, %v271
  %v600 = vmul.f32 %v426, %v271
  %v601 = vmul.f32 %v429, %v271
  %v602 = vmul.f32 %v432, %v271
  %v603 = vmul.f32 %v435, %v271
  %v604 = vmul.f32 %v438, %v271
  %v605 = vmul.f32 %v441, %v271
  %v606 = vmul.f32 %v444, %v271
  %v607 = vmul.f32 %v447, %v271
  %v608 = vmul.f32 %v450, %v271
  %v609 = vmul.f32 %v453, %v271
  %v610 = vmul.f32 %v456, %v271
  %v611 = vmul.f32 %v459, %v271
  %v612 = vmul.f32 %v462, %v271
  %v613 = vmul.f32 %v465, %v271
  %v614 = vmul.f32 %v468, %v271
  %v615 = vmul.f32 %v471, %v271
  %v616 = vmul.f32 %v474, %v271
  %v617 = vmul.f32 %v477, %v271
  %v618 = vmul.f32 %v480, %v271
  %v619 = vmul.f32 %v483, %v271
  %v620 = vmul.f32 %v486, %v271
  %v621 = vmul.f32 %v489, %v271
  %v622 = vmul.f32 %v492, %v271
  %v623 = vmul.f32 %v495, %v271
  %v624 = vmul.f32 %v498, %v271
  %v625 = vmul.f32 %v501, %v271
  %v626 = vmul.f32 %v504, %v271
  %v627 = vmul.f32 %v507, %v271
  %v628 = vmul.f32 %v510, %v271
  %v629 = vmul.f32 %v513, %v271
  %v630 = vmul.f32 %v516, %v271
  %v631 = vmul.f32 %v519, %v271
  %v632 = vmul.f32 %v522, %v271
  %v633 = vmul.f32 %v525, %v271
  %v634 = vmul.f32 %v528, %v271
  %v635 = vmul.f32 %v531, %v271
  %v636 = vmul.f32 %v534, %v271
  %v637 = vmul.f32 %v537, %v271
  %v638 = vmul.f32 %v540, %v271
  %v639 = vmul.f32 %v543, %v271
  %v640 = vmul.f32 %v546, %v271
  %v641 = vmul.f32 %v549, %v271
  %v642 = vmul.f32 %v552, %v271
  %v643 = vmul.f32 %v555, %v271
  %v644 = vmul.f32 %v558, %v271
  %v645 = vmul.f32 %v561, %v271
  %v646 = vmul.f32 %v564, %v271
  %v647 = vmul.f32 %v567, %v271
  %v648 = vmul.f32 %v570, %v271
  %v649 = vmul.f32 %v573, %v271
  %v650 = vmul.f32 %v576, %v271
  %v651 = vmul.f32 %v579, %v271
  %v652 = vmul.f32 %v582, %v271
  %v653 = vmul.f32 %v585, %v271
  %v654 = vmul.f32 %v588, %v271
  %v655 = vmul.f32 %v591, %v271
  %v656 = vmul.f32 %v272, %v272
  %v657 = vmul.f32 %v273, %v273
  %v658 = vmul.f32 %v274, %v274
  %v659 = vmul.f32 %v275, %v275
  %v660 = vmul.f32 %v276, %v276
  %v661 = vmul.f32 %v277, %v277
  %v662 = vmul.f32 %v278, %v278
  %v663 = vmul.f32 %v279, %v279
  %v664 = vmul.f32 %v280, %v280
  %v665 = vmul.f32 %v281, %v281
  %v666 = vmul.f32 %v282, %v282
  %v667 = vmul.f32 %v283, %v283
  %v668 = vmul.f32 %v284, %v284
  %v669 = vmul.f32 %v285, %v285
  %v670 = vmul.f32 %v286, %v286
  %v671 = vmul.f32 %v287, %v287
  %v672 = vmul.f32 %v288, %v288
  %v673 = vmul.f32 %v289, %v289
  %v674 = vmul.f32 %v290, %v290
  %v675 = vmul.f32 %v291, %v291
  %v676 = vmul.f32 %v292, %v292
  %v677 = vmul.f32 %v293, %v293
  %v678 = vmul.f32 %v294, %v294
  %v679 = vmul.f32 %v295, %v295
  %v680 = vmul.f32 %v296, %v296
  %v681 = vmul.f32 %v297, %v297
  %v682 = vmul.f32 %v298, %v298
  %v683 = vmul.f32 %v299, %v299
  %v684 = vmul.f32 %v300, %v300
  %v685 = vmul.f32 %v301, %v301
  %v686 = vmul.f32 %v302, %v302
  %v687 = vmul.f32 %v303, %v303
  %v688 = vmul.f32 %v304, %v304
  %v689 = vmul.f32 %v305, %v305
  %v690 = vmul.f32 %v306, %v306
  %v691 = vmul.f32 %v307, %v307
  %v692 = vmul.f32 %v308, %v308
  %v693 = vmul.f32 %v309, %v309
  %v694 = vmul.f32 %v310, %v310
  %v695 = vmul.f32 %v311, %v311
  %v696 = vmul.f32 %v312, %v312
  %v697 = vmul.f32 %v313, %v313
  %v698 = vmul.f32 %v314, %v314
  %v699 = vmul.f32 %v315, %v315
  %v700 = vmul.f32 %v316, %v316
  %v701 = vmul.f32 %v317, %v317
  %v702 = vmul.f32 %v318, %v318
  %v703 = vmul.f32 %v319, %v319
  %v704 = vmul.f32 %v320, %v320
  %v705 = vmul.f32 %v321, %v321
  %v706 = vmul.f32 %v322, %v322
  %v707 = vmul.f32 %v323, %v323
  %v708 = vmul.f32 %v324, %v324
  %v709 = vmul.f32 %v325, %v325
  %v710 = vmul.f32 %v326, %v326
  %v711 = vmul.f32 %v327, %v327
  %v712 = vmul.f32 %v328, %v328
  %v713 = vmul.f32 %v329, %v329
  %v714 = vmul.f32 %v330, %v330
  %v715 = vmul.f32 %v331, %v331
  %v716 = vmul.f32 %v332, %v332
  %v717 = vmul.f32 %v333, %v333
  %v718 = vmul.f32 %v334, %v334
  %v719 = vmul.f32 %v335, %v335
  %v720 = vsub.f32 %v592, %v656
  %v721 = vsub.f32 %v593, %v657
  %v722 = vsub.f32 %v594, %v658
  %v723 = vsub.f32 %v595, %v659
  %v724 = vsub.f32 %v596, %v660
  %v725 = vsub.f32 %v597, %v661
  %v726 = vsub.f32 %v598, %v662
  %v727 = vsub.f32 %v599, %v663
  %v728 = vsub.f32 %v600, %v664
  %v729 = vsub.f32 %v601, %v665
  %v730 = vsub.f32 %v602, %v666
  %v731 = vsub.f32 %v603, %v667
  %v732 = vsub.f32 %v604, %v668
  %v733 = vsub.f32 %v605, %v669
  %v734 = vsub.f32 %v606, %v670
  %v735 = vsub.f32 %v607, %v671
  %v736 = vsub.f32 %v608, %v672
  %v737 = vsub.f32 %v609, %v673
  %v738 = vsub.f32 %v610, %v674
  %v739 = vsub.f32 %v611, %v675
  %v740 = vsub.f32 %v612, %v676
  %v741 = vsub.f32 %v613, %v677
  %v742 = vsub.f32 %v614, %v678
  %v743 = vsub.f32 %v615, %v679
  %v744 = vsub.f32 %v616, %v680
  %v745 = vsub.f32 %v617, %v681
  %v746 = vsub.f32 %v618, %v682
  %v747 = vsub.f32 %v619, %v683
  %v748 = vsub.f32 %v620, %v684
  %v749 = vsub.f32 %v621, %v685
  %v750 = vsub.f32 %v622, %v686
  %v751 = vsub.f32 %v623, %v687
  %v752 = vsub.f32 %v624, %v688
  %v753 = vsub.f32 %v625, %v689
  %v754 = vsub.f32 %v626, %v690
  %v755 = vsub.f32 %v627, %v691
  %v756 = vsub.f32 %v628, %v692
  %v757 = vsub.f32 %v629, %v693
  %v758 = vsub.f32 %v630, %v694
  %v759 = vsub.f32 %v631, %v695
  %v760 = vsub.f32 %v632, %v696
  %v761 = vsub.f32 %v633, %v697
  %v762 = vsub.f32 %v634, %v698
  %v763 = vsub.f32 %v635, %v699
  %v764 = vsub.f32 %v636, %v700
  %v765 = vsub.f32 %v637, %v701
  %v766 = vsub.f32 %v638, %v702
  %v767 = vsub.f32 %v639, %v703
  %v768 = vsub.f32 %v640, %v704
  %v769 = vsub.f32 %v641, %v705
  %v770 = vsub.f32 %v642, %v706
  %v771 = vsub.f32 %v643, %v707
  %v772 = vsub.f32 %v644, %v708
  %v773 = vsub.f32 %v645, %v709
  %v774 = vsub.f32 %v646, %v710
  %v775 = vsub.f32 %v647, %v711
  %v776 = vsub.f32 %v648, %v712
  %v777 = vsub.f32 %v649, %v713
  %v778 = vsub.f32 %v650, %v714
  %v779 = vsub.f32 %v651, %v715
  %v780 = vsub.f32 %v652, %v716
  %v781 = vsub.f32 %v653, %v717
  %v782 = vsub.f32 %v654, %v718
  %v783 = vsub.f32 %v655, %v719
  %v784 = vmax.f32 %v720, 0.0
  %v785 = vmax.f32 %v721, 0.0
  %v786 = vmax.f32 %v722, 0.0
  %v787 = vmax.f32 %v723, 0.0
  %v788 = vmax.f32 %v724, 0.0
  %v789 = vmax.f32 %v725, 0.0
  %v790 = vmax.f32 %v726, 0.0
  %v791 = vmax.f32 %v727, 0.0
  %v792 = vmax.f32 %v728, 0.0
  %v793 = vmax.f32 %v729, 0.0
  %v794 = vmax.f32 %v730, 0.0
  %v795 = vmax.f32 %v731, 0.0
  %v796 = vmax.f32 %v732, 0.0
  %v797 = vmax.f32 %v733, 0.0
  %v798 = vmax.f32 %v734, 0.0
  %v799 = vmax.f32 %v735, 0.0
  %v800 = vmax.f32 %v736, 0.0
  %v801 = vmax.f32 %v737, 0.0
  %v802 = vmax.f32 %v738, 0.0
  %v803 = vmax.f32 %v739, 0.0
  %v804 = vmax.f32 %v740, 0.0
  %v805 = vmax.f32 %v741, 0.0
  %v806 = vmax.f32 %v742, 0.0
  %v807 = vmax.f32 %v743, 0.0
  %v808 = vmax.f32 %v744, 0.0
  %v809 = vmax.f32 %v745, 0.0
  %v810 = vmax.f32 %v746, 0.0
  %v811 = vmax.f32 %v747, 0.0
  %v812 = vmax.f32 %v748, 0.0
  %v813 = vmax.f32 %v749, 0.0
  %v814 = vmax.f32 %v750, 0.0
  %v815 = vmax.f32 %v751, 0.0
  %v816 = vmax.f32 %v752, 0.0
  %v817 = vmax.f32 %v753, 0.0
  %v818 = vmax.f32 %v754, 0.0
  %v819 = vmax.f32 %v755, 0.0
  %v820 = vmax.f32 %v756, 0.0
  %v821 = vmax.f32 %v757, 0.0
  %v822 = vmax.f32 %v758, 0.0
  %v823 = vmax.f32 %v759, 0.0
  %v824 = vmax.f32 %v760, 0.0
  %v825 = vmax.f32 %v761, 0.0
  %v826 = vmax.f32 %v762, 0.0
  %v827 = vmax.f32 %v763, 0.0
  %v828 = vmax.f32 %v764, 0.0
  %v829 = vmax.f32 %v765, 0.0
  %v830 = vmax.f32 %v766, 0.0
  %v831 = vmax.f32 %v767, 0.0
  %v832 = vmax.f32 %v768, 0.0
  %v833 = vmax.f32 %v769, 0.0
  %v834 = vmax.f32 %v770, 0.0
  %v835 = vmax.f32 %v771, 0.0
  %v836 = vmax.f32 %v772, 0.0
  %v837 = vmax.f32 %v773, 0.0
  %v838 = vmax.f32 %v774, 0.0
  %v839 = vmax.f32 %v775, 0.0
  %v840 = vmax.f32 %v776, 0.0
  %v841 = vmax.f32 %v777, 0.0
  %v842 = vmax.f32 %v778, 0.0
  %v843 = vmax.f32 %v779, 0.0
  %v844 = vmax.f32 %v780, 0.0
  %v845 = vmax.f32 %v781, 0.0
  %v846 = vmax.f32 %v782, 0.0
  %v847 = vmax.f32 %v783, 0.0
  %v848 = vadd.f32 %v784, 1e-05
  %v849 = vadd.f32 %v785, 1e-05
  %v850 = vadd.f32 %v786, 1e-05
  %v851 = vadd.f32 %v787, 1e-05
  %v852 = vadd.f32 %v788, 1e-05
  %v853 = vadd.f32 %v789, 1e-05
  %v854 = vadd.f32 %v790, 1e-05
  %v855 = vadd.f32 %v791, 1e-05
  %v856 = vadd.f32 %v792, 1e-05
  %v857 = vadd.f32 %v793, 1e-05
  %v858 = vadd.f32 %v794, 1e-05
  %v859 = vadd.f32 %v795, 1e-05
  %v860 = vadd.f32 %v796, 1e-05
  %v861 = vadd.f32 %v797, 1e-05
  %v862 = vadd.f32 %v798, 1e-05
  %v863 = vadd.f32 %v799, 1e-05
  %v864 = vadd.f32 %v800, 1e-05
  %v865 = vadd.f32 %v801, 1e-05
  %v866 = vadd.f32 %v802, 1e-05
  %v867 = vadd.f32 %v803, 1e-05
  %v868 = vadd.f32 %v804, 1e-05
  %v869 = vadd.f32 %v805, 1e-05
  %v870 = vadd.f32 %v806, 1e-05
  %v871 = vadd.f32 %v807, 1e-05
  %v872 = vadd.f32 %v808, 1e-05
  %v873 = vadd.f32 %v809, 1e-05
  %v874 = vadd.f32 %v810, 1e-05
  %v875 = vadd.f32 %v811, 1e-05
  %v876 = vadd.f32 %v812, 1e-05
  %v877 = vadd.f32 %v813, 1e-05
  %v878 = vadd.f32 %v814, 1e-05
  %v879 = vadd.f32 %v815, 1e-05
  %v880 = vadd.f32 %v816, 1e-05
  %v881 = vadd.f32 %v817, 1e-05
  %v882 = vadd.f32 %v818, 1e-05
  %v883 = vadd.f32 %v819, 1e-05
  %v884 = vadd.f32 %v820, 1e-05
  %v885 = vadd.f32 %v821, 1e-05
  %v886 = vadd.f32 %v822, 1e-05
  %v887 = vadd.f32 %v823, 1e-05
  %v888 = vadd.f32 %v824, 1e-05
  %v889 = vadd.f32 %v825, 1e-05
  %v890 = vadd.f32 %v826, 1e-05
  %v891 = vadd.f32 %v827, 1e-05
  %v892 = vadd.f32 %v828, 1e-05
  %v893 = vadd.f32 %v829, 1e-05
  %v894 = vadd.f32 %v830, 1e-05
  %v895 = vadd.f32 %v831, 1e-05
  %v896 = vadd.f32 %v832, 1e-05
  %v897 = vadd.f32 %v833, 1e-05
  %v898 = vadd.f32 %v834, 1e-05
  %v899 = vadd.f32 %v835, 1e-05
  %v900 = vadd.f32 %v836, 1e-05
  %v901 = vadd.f32 %v837, 1e-05
  %v902 = vadd.f32 %v838, 1e-05
  %v903 = vadd.f32 %v839, 1e-05
  %v904 = vadd.f32 %v840, 1e-05
  %v905 = vadd.f32 %v841, 1e-05
  %v906 = vadd.f32 %v842, 1e-05
  %v907 = vadd.f32 %v843, 1e-05
  %v908 = vadd.f32 %v844, 1e-05
  %v909 = vadd.f32 %v845, 1e-05
  %v910 = vadd.f32 %v846, 1e-05
  %v911 = vadd.f32 %v847, 1e-05
  %v912 = vrsqrt.pop %v848
  %v913 = vrsqrt.pop %v849
  %v914 = vrsqrt.pop %v850
  %v915 = vrsqrt.pop %v851
  %v916 = vrsqrt.pop %v852
  %v917 = vrsqrt.pop %v853
  %v918 = vrsqrt.pop %v854
  %v919 = vrsqrt.pop %v855
  %v920 = vrsqrt.pop %v856
  %v921 = vrsqrt.pop %v857
  %v922 = vrsqrt.pop %v858
  %v923 = vrsqrt.pop %v859
  %v924 = vrsqrt.pop %v860
  %v925 = vrsqrt.pop %v861
  %v926 = vrsqrt.pop %v862
  %v927 = vrsqrt.pop %v863
  %v928 = vrsqrt.pop %v864
  %v929 = vrsqrt.pop %v865
  %v930 = vrsqrt.pop %v866
  %v931 = vrsqrt.pop %v867
  %v932 = vrsqrt.pop %v868
  %v933 = vrsqrt.pop %v869
  %v934 = vrsqrt.pop %v870
  %v935 = vrsqrt.pop %v871
  %v936 = vrsqrt.pop %v872
  %v937 = vrsqrt.pop %v873
  %v938 = vrsqrt.pop %v874
  %v939 = vrsqrt.pop %v875
  %v940 = vrsqrt.pop %v876
  %v941 = vrsqrt.pop %v877
  %v942 = vrsqrt.pop %v878
  %v943 = vrsqrt.pop %v879
  %v944 = vrsqrt.pop %v880
  %v945 = vrsqrt.pop %v881
  %v946 = vrsqrt.pop %v882
  %v947 = vrsqrt.pop %v883
  %v948 = vrsqrt.pop %v884
  %v949 = vrsqrt.pop %v885
  %v950 = vrsqrt.pop %v886
  %v951 = vrsqrt.pop %v887
  %v952 = vrsqrt.pop %v888
  %v953 = vrsqrt.pop %v889
  %v954 = vrsqrt.pop %v890
  %v955 = vrsqrt.pop %v891
  %v956 = vrsqrt.pop %v892
  %v957 = vrsqrt.pop %v893
  %v958 = vrsqrt.pop %v894
  %v959 = vrsqrt.pop %v895
  %v960 = vrsqrt.pop %v896
  %v961 = vrsqrt.pop %v897
  %v962 = vrsqrt.pop %v898
  %v963 = vrsqrt.pop %v899
  %v964 = vrsqrt.pop %v900
  %v965 = vrsqrt.pop %v901
  %v966 = vrsqrt.pop %v902
  %v967 = vrsqrt.pop %v903
  %v968 = vrsqrt.pop %v904
  %v969 = vrsqrt.pop %v905
  %v970 = vrsqrt.pop %v906
  %v971 = vrsqrt.pop %v907
  %v972 = vrsqrt.pop %v908
  %v973 = vrsqrt.pop %v909
  %v974 = vrsqrt.pop %v910
  %v975 = vrsqrt.pop %v911
  %v976 = vld [vmem:[%s1] sm:$0x1]
  %v977 = vld [vmem:[%s2] sm:$0x1]
  %v978 = vsub.f32 %v14, %v272
  %v979 = vsub.f32 %v15, %v273
  %v980 = vsub.f32 %v16, %v274
  %v981 = vsub.f32 %v17, %v275
  %v982 = vsub.f32 %v18, %v276
  %v983 = vsub.f32 %v19, %v277
  %v984 = vsub.f32 %v20, %v278
  %v985 = vsub.f32 %v21, %v279
  %v986 = vsub.f32 %v22, %v280
  %v987 = vsub.f32 %v23, %v281
  %v988 = vsub.f32 %v24, %v282
  %v989 = vsub.f32 %v25, %v283
  %v990 = vsub.f32 %v26, %v284
  %v991 = vsub.f32 %v27, %v285
  %v992 = vsub.f32 %v28, %v286
  %v993 = vsub.f32 %v29, %v287
  %v994 = vsub.f32 %v30, %v288
  %v995 = vsub.f32 %v31, %v289
  %v996 = vsub.f32 %v32, %v290
  %v997 = vsub.f32 %v33, %v291
  %v998 = vsub.f32 %v34, %v292
  %v999 = vsub.f32 %v35, %v293
  %v1000 = vsub.f32 %v36, %v294
  %v1001 = vsub.f32 %v37, %v295
  %v1002 = vsub.f32 %v38, %v296
  %v1003 = vsub.f32 %v39, %v297
  %v1004 = vsub.f32 %v40, %v298
  %v1005 = vsub.f32 %v41, %v299
  %v1006 = vsub.f32 %v42, %v300
  %v1007 = vsub.f32 %v43, %v301
  %v1008 = vsub.f32 %v44, %v302
  %v1009 = vsub.f32 %v45, %v303
  %v1010 = vsub.f32 %v46, %v304
  %v1011 = vsub.f32 %v47, %v305
  %v1012 = vsub.f32 %v48, %v306
  %v1013 = vsub.f32 %v49, %v307
  %v1014 = vsub.f32 %v50, %v308
  %v1015 = vsub.f32 %v51, %v309
  %v1016 = vsub.f32 %v52, %v310
  %v1017 = vsub.f32 %v53, %v311
  %v1018 = vsub.f32 %v54, %v312
  %v1019 = vsub.f32 %v55, %v313
  %v1020 = vsub.f32 %v56, %v314
  %v1021 = vsub.f32 %v57, %v315
  %v1022 = vsub.f32 %v58, %v316
  %v1023 = vsub.f32 %v59, %v317
  %v1024 = vsub.f32 %v60, %v318
  %v1025 = vsub.f32 %v61, %v319
  %v1026 = vsub.f32 %v62, %v320
  %v1027 = vsub.f32 %v63, %v321
  %v1028 = vsub.f32 %v64, %v322
  %v1029 = vsub.f32 %v65, %v323
  %v1030 = vsub.f32 %v66, %v324
  %v1031 = vsub.f32 %v67, %v325
  %v1032 = vsub.f32 %v68, %v326
  %v1033 = vsub.f32 %v69, %v327
  %v1034 = vsub.f32 %v70, %v328
  %v1035 = vsub.f32 %v71, %v329
  %v1036 = vsub.f32 %v72, %v330
  %v1037 = vsub.f32 %v73, %v331
  %v1038 = vsub.f32 %v74, %v332
  %v1039 = vsub.f32 %v75, %v333
  %v1040 = vsub.f32 %v76, %v334
  %v1041 = vsub.f32 %v77, %v335
  %v1042 = vmul.f32 %v978, %v912
  %v1043 = vmul.f32 %v979, %v913
  %v1044 = vmul.f32 %v980, %v914
  %v1045 = vmul.f32 %v981, %v915
  %v1046 = vmul.f32 %v982, %v916
  %v1047 = vmul.f32 %v983, %v917
  %v1048 = vmul.f32 %v984, %v918
  %v1049 = vmul.f32 %v985, %v919
  %v1050 = vmul.f32 %v986, %v920
  %v1051 = vmul.f32 %v987, %v921
  %v1052 = vmul.f32 %v988, %v922
  %v1053 = vmul.f32 %v989, %v923
  %v1054 = vmul.f32 %v990, %v924
  %v1055 = vmul.f32 %v991, %v925
  %v1056 = vmul.f32 %v992, %v926
  %v1057 = vmul.f32 %v993, %v927
  %v1058 = vmul.f32 %v994, %v928
  %v1059 = vmul.f32 %v995, %v929
  %v1060 = vmul.f32 %v996, %v930
  %v1061 = vmul.f32 %v997, %v931
  %v1062 = vmul.f32 %v998, %v932
  %v1063 = vmul.f32 %v999, %v933
  %v1064 = vmul.f32 %v1000, %v934
  %v1065 = vmul.f32 %v1001, %v935
  %v1066 = vmul.f32 %v1002, %v936
  %v1067 = vmul.f32 %v1003, %v937
  %v1068 = vmul.f32 %v1004, %v938
  %v1069 = vmul.f32 %v1005, %v939
  %v1070 = vmul.f32 %v1006, %v940
  %v1071 = vmul.f32 %v1007, %v941
  %v1072 = vmul.f32 %v1008, %v942
  %v1073 = vmul.f32 %v1009, %v943
  %v1074 = vmul.f32 %v1010, %v944
  %v1075 = vmul.f32 %v1011, %v945
  %v1076 = vmul.f32 %v1012, %v946
  %v1077 = vmul.f32 %v1013, %v947
  %v1078 = vmul.f32 %v1014, %v948
  %v1079 = vmul.f32 %v1015, %v949
  %v1080 = vmul.f32 %v1016, %v950
  %v1081 = vmul.f32 %v1017, %v951
  %v1082 = vmul.f32 %v1018, %v952
  %v1083 = vmul.f32 %v1019, %v953
  %v1084 = vmul.f32 %v1020, %v954
  %v1085 = vmul.f32 %v1021, %v955
  %v1086 = vmul.f32 %v1022, %v956
  %v1087 = vmul.f32 %v1023, %v957
  %v1088 = vmul.f32 %v1024, %v958
  %v1089 = vmul.f32 %v1025, %v959
  %v1090 = vmul.f32 %v1026, %v960
  %v1091 = vmul.f32 %v1027, %v961
  %v1092 = vmul.f32 %v1028, %v962
  %v1093 = vmul.f32 %v1029, %v963
  %v1094 = vmul.f32 %v1030, %v964
  %v1095 = vmul.f32 %v1031, %v965
  %v1096 = vmul.f32 %v1032, %v966
  %v1097 = vmul.f32 %v1033, %v967
  %v1098 = vmul.f32 %v1034, %v968
  %v1099 = vmul.f32 %v1035, %v969
  %v1100 = vmul.f32 %v1036, %v970
  %v1101 = vmul.f32 %v1037, %v971
  %v1102 = vmul.f32 %v1038, %v972
  %v1103 = vmul.f32 %v1039, %v973
  %v1104 = vmul.f32 %v1040, %v974
  %v1105 = vmul.f32 %v1041, %v975
  %v1107 = vlaneseq
  %v1108 = vshrl.u32 %v1107, 7
  %v1109 = vsub.s32 0, %v1108
  %v1110 = vrot.slane %v976, %v1109
  %v1112 = vmul.f32 %v1042, %v1110
  %v1113 = vmul.f32 %v1043, %v1110
  %v1114 = vmul.f32 %v1044, %v1110
  %v1115 = vmul.f32 %v1045, %v1110
  %v1116 = vmul.f32 %v1046, %v1110
  %v1117 = vmul.f32 %v1047, %v1110
  %v1118 = vmul.f32 %v1048, %v1110
  %v1119 = vmul.f32 %v1049, %v1110
  %v1120 = vmul.f32 %v1050, %v1110
  %v1121 = vmul.f32 %v1051, %v1110
  %v1122 = vmul.f32 %v1052, %v1110
  %v1123 = vmul.f32 %v1053, %v1110
  %v1124 = vmul.f32 %v1054, %v1110
  %v1125 = vmul.f32 %v1055, %v1110
  %v1126 = vmul.f32 %v1056, %v1110
  %v1127 = vmul.f32 %v1057, %v1110
  %v1128 = vmul.f32 %v1058, %v1110
  %v1129 = vmul.f32 %v1059, %v1110
  %v1130 = vmul.f32 %v1060, %v1110
  %v1131 = vmul.f32 %v1061, %v1110
  %v1132 = vmul.f32 %v1062, %v1110
  %v1133 = vmul.f32 %v1063, %v1110
  %v1134 = vmul.f32 %v1064, %v1110
  %v1135 = vmul.f32 %v1065, %v1110
  %v1136 = vmul.f32 %v1066, %v1110
  %v1137 = vmul.f32 %v1067, %v1110
  %v1138 = vmul.f32 %v1068, %v1110
  %v1139 = vmul.f32 %v1069, %v1110
  %v1140 = vmul.f32 %v1070, %v1110
  %v1141 = vmul.f32 %v1071, %v1110
  %v1142 = vmul.f32 %v1072, %v1110
  %v1143 = vmul.f32 %v1073, %v1110
  %v1144 = vmul.f32 %v1074, %v1110
  %v1145 = vmul.f32 %v1075, %v1110
  %v1146 = vmul.f32 %v1076, %v1110
  %v1147 = vmul.f32 %v1077, %v1110
  %v1148 = vmul.f32 %v1078, %v1110
  %v1149 = vmul.f32 %v1079, %v1110
  %v1150 = vmul.f32 %v1080, %v1110
  %v1151 = vmul.f32 %v1081, %v1110
  %v1152 = vmul.f32 %v1082, %v1110
  %v1153 = vmul.f32 %v1083, %v1110
  %v1154 = vmul.f32 %v1084, %v1110
  %v1155 = vmul.f32 %v1085, %v1110
  %v1156 = vmul.f32 %v1086, %v1110
  %v1157 = vmul.f32 %v1087, %v1110
  %v1158 = vmul.f32 %v1088, %v1110
  %v1159 = vmul.f32 %v1089, %v1110
  %v1160 = vmul.f32 %v1090, %v1110
  %v1161 = vmul.f32 %v1091, %v1110
  %v1162 = vmul.f32 %v1092, %v1110
  %v1163 = vmul.f32 %v1093, %v1110
  %v1164 = vmul.f32 %v1094, %v1110
  %v1165 = vmul.f32 %v1095, %v1110
  %v1166 = vmul.f32 %v1096, %v1110
  %v1167 = vmul.f32 %v1097, %v1110
  %v1168 = vmul.f32 %v1098, %v1110
  %v1169 = vmul.f32 %v1099, %v1110
  %v1170 = vmul.f32 %v1100, %v1110
  %v1171 = vmul.f32 %v1101, %v1110
  %v1172 = vmul.f32 %v1102, %v1110
  %v1173 = vmul.f32 %v1103, %v1110
  %v1174 = vmul.f32 %v1104, %v1110
  %v1175 = vmul.f32 %v1105, %v1110
  %v1177 = vlaneseq
  %v1178 = vshrl.u32 %v1177, 7
  %v1179 = vsub.s32 0, %v1178
  %v1180 = vrot.slane %v977, %v1179
  %v1182 = vadd.f32 %v1112, %v1180
  %v1183 = vadd.f32 %v1113, %v1180
  %v1184 = vadd.f32 %v1114, %v1180
  %v1185 = vadd.f32 %v1115, %v1180
  %v1186 = vadd.f32 %v1116, %v1180
  %v1187 = vadd.f32 %v1117, %v1180
  %v1188 = vadd.f32 %v1118, %v1180
  %v1189 = vadd.f32 %v1119, %v1180
  %v1190 = vadd.f32 %v1120, %v1180
  %v1191 = vadd.f32 %v1121, %v1180
  %v1192 = vadd.f32 %v1122, %v1180
  %v1193 = vadd.f32 %v1123, %v1180
  %v1194 = vadd.f32 %v1124, %v1180
  %v1195 = vadd.f32 %v1125, %v1180
  %v1196 = vadd.f32 %v1126, %v1180
  %v1197 = vadd.f32 %v1127, %v1180
  %v1198 = vadd.f32 %v1128, %v1180
  %v1199 = vadd.f32 %v1129, %v1180
  %v1200 = vadd.f32 %v1130, %v1180
  %v1201 = vadd.f32 %v1131, %v1180
  %v1202 = vadd.f32 %v1132, %v1180
  %v1203 = vadd.f32 %v1133, %v1180
  %v1204 = vadd.f32 %v1134, %v1180
  %v1205 = vadd.f32 %v1135, %v1180
  %v1206 = vadd.f32 %v1136, %v1180
  %v1207 = vadd.f32 %v1137, %v1180
  %v1208 = vadd.f32 %v1138, %v1180
  %v1209 = vadd.f32 %v1139, %v1180
  %v1210 = vadd.f32 %v1140, %v1180
  %v1211 = vadd.f32 %v1141, %v1180
  %v1212 = vadd.f32 %v1142, %v1180
  %v1213 = vadd.f32 %v1143, %v1180
  %v1214 = vadd.f32 %v1144, %v1180
  %v1215 = vadd.f32 %v1145, %v1180
  %v1216 = vadd.f32 %v1146, %v1180
  %v1217 = vadd.f32 %v1147, %v1180
  %v1218 = vadd.f32 %v1148, %v1180
  %v1219 = vadd.f32 %v1149, %v1180
  %v1220 = vadd.f32 %v1150, %v1180
  %v1221 = vadd.f32 %v1151, %v1180
  %v1222 = vadd.f32 %v1152, %v1180
  %v1223 = vadd.f32 %v1153, %v1180
  %v1224 = vadd.f32 %v1154, %v1180
  %v1225 = vadd.f32 %v1155, %v1180
  %v1226 = vadd.f32 %v1156, %v1180
  %v1227 = vadd.f32 %v1157, %v1180
  %v1228 = vadd.f32 %v1158, %v1180
  %v1229 = vadd.f32 %v1159, %v1180
  %v1230 = vadd.f32 %v1160, %v1180
  %v1231 = vadd.f32 %v1161, %v1180
  %v1232 = vadd.f32 %v1162, %v1180
  %v1233 = vadd.f32 %v1163, %v1180
  %v1234 = vadd.f32 %v1164, %v1180
  %v1235 = vadd.f32 %v1165, %v1180
  %v1236 = vadd.f32 %v1166, %v1180
  %v1237 = vadd.f32 %v1167, %v1180
  %v1238 = vadd.f32 %v1168, %v1180
  %v1239 = vadd.f32 %v1169, %v1180
  %v1240 = vadd.f32 %v1170, %v1180
  %v1241 = vadd.f32 %v1171, %v1180
  %v1242 = vadd.f32 %v1172, %v1180
  %v1243 = vadd.f32 %v1173, %v1180
  %v1244 = vadd.f32 %v1174, %v1180
  %v1245 = vadd.f32 %v1175, %v1180
  %1246 = vst.msk [vmem:[%s3] sm:$0xff] %vm78, %v1182
  %1247 = vst.msk [vmem:[%s3 + $0x8] sm:$0xff] %vm78, %v1183
  %1248 = vst.msk [vmem:[%s3 + $0x10] sm:$0xff] %vm78, %v1184
  %1249 = vst.msk [vmem:[%s3 + $0x18] sm:$0xff] %vm78, %v1185
  %1250 = vst.msk [vmem:[%s3 + $0x20] sm:$0xff] %vm78, %v1186
  %1251 = vst.msk [vmem:[%s3 + $0x28] sm:$0xff] %vm78, %v1187
  %1252 = vst.msk [vmem:[%s3 + $0x30] sm:$0xff] %vm78, %v1188
  %1253 = vst.msk [vmem:[%s3 + $0x38] sm:$0xff] %vm78, %v1189
  %1254 = vst.msk [vmem:[%s3 + $0x40] sm:$0xff] %vm78, %v1190
  %1255 = vst.msk [vmem:[%s3 + $0x48] sm:$0xff] %vm78, %v1191
  %1256 = vst.msk [vmem:[%s3 + $0x50] sm:$0xff] %vm78, %v1192
  %1257 = vst.msk [vmem:[%s3 + $0x58] sm:$0xff] %vm78, %v1193
  %1258 = vst.msk [vmem:[%s3 + $0x60] sm:$0xff] %vm78, %v1194
  %1259 = vst.msk [vmem:[%s3 + $0x68] sm:$0xff] %vm78, %v1195
  %1260 = vst.msk [vmem:[%s3 + $0x70] sm:$0xff] %vm78, %v1196
  %1261 = vst.msk [vmem:[%s3 + $0x78] sm:$0xff] %vm78, %v1197
  %1262 = vst.msk [vmem:[%s3 + $0x80] sm:$0xff] %vm78, %v1198
  %1263 = vst.msk [vmem:[%s3 + $0x88] sm:$0xff] %vm78, %v1199
  %1264 = vst.msk [vmem:[%s3 + $0x90] sm:$0xff] %vm78, %v1200
  %1265 = vst.msk [vmem:[%s3 + $0x98] sm:$0xff] %vm78, %v1201
  %1266 = vst.msk [vmem:[%s3 + $0xa0] sm:$0xff] %vm78, %v1202
  %1267 = vst.msk [vmem:[%s3 + $0xa8] sm:$0xff] %vm78, %v1203
  %1268 = vst.msk [vmem:[%s3 + $0xb0] sm:$0xff] %vm78, %v1204
  %1269 = vst.msk [vmem:[%s3 + $0xb8] sm:$0xff] %vm78, %v1205
  %1270 = vst.msk [vmem:[%s3 + $0xc0] sm:$0xff] %vm78, %v1206
  %1271 = vst.msk [vmem:[%s3 + $0xc8] sm:$0xff] %vm78, %v1207
  %1272 = vst.msk [vmem:[%s3 + $0xd0] sm:$0xff] %vm78, %v1208
  %1273 = vst.msk [vmem:[%s3 + $0xd8] sm:$0xff] %vm78, %v1209
  %1274 = vst.msk [vmem:[%s3 + $0xe0] sm:$0xff] %vm78, %v1210
  %1275 = vst.msk [vmem:[%s3 + $0xe8] sm:$0xff] %vm78, %v1211
  %1276 = vst.msk [vmem:[%s3 + $0xf0] sm:$0xff] %vm78, %v1212
  %1277 = vst.msk [vmem:[%s3 + $0xf8] sm:$0xff] %vm78, %v1213
  %1278 = vst.msk [vmem:[%s3 + $0x100] sm:$0xff] %vm78, %v1214
  %1279 = vst.msk [vmem:[%s3 + $0x108] sm:$0xff] %vm78, %v1215
  %1280 = vst.msk [vmem:[%s3 + $0x110] sm:$0xff] %vm78, %v1216
  %1281 = vst.msk [vmem:[%s3 + $0x118] sm:$0xff] %vm78, %v1217
  %1282 = vst.msk [vmem:[%s3 + $0x120] sm:$0xff] %vm78, %v1218
  %1283 = vst.msk [vmem:[%s3 + $0x128] sm:$0xff] %vm78, %v1219
  %1284 = vst.msk [vmem:[%s3 + $0x130] sm:$0xff] %vm78, %v1220
  %1285 = vst.msk [vmem:[%s3 + $0x138] sm:$0xff] %vm78, %v1221
  %1286 = vst.msk [vmem:[%s3 + $0x140] sm:$0xff] %vm78, %v1222
  %1287 = vst.msk [vmem:[%s3 + $0x148] sm:$0xff] %vm78, %v1223
  %1288 = vst.msk [vmem:[%s3 + $0x150] sm:$0xff] %vm78, %v1224
  %1289 = vst.msk [vmem:[%s3 + $0x158] sm:$0xff] %vm78, %v1225
  %1290 = vst.msk [vmem:[%s3 + $0x160] sm:$0xff] %vm78, %v1226
  %1291 = vst.msk [vmem:[%s3 + $0x168] sm:$0xff] %vm78, %v1227
  %1292 = vst.msk [vmem:[%s3 + $0x170] sm:$0xff] %vm78, %v1228
  %1293 = vst.msk [vmem:[%s3 + $0x178] sm:$0xff] %vm78, %v1229
  %1294 = vst.msk [vmem:[%s3 + $0x180] sm:$0xff] %vm78, %v1230
  %1295 = vst.msk [vmem:[%s3 + $0x188] sm:$0xff] %vm78, %v1231
  %1296 = vst.msk [vmem:[%s3 + $0x190] sm:$0xff] %vm78, %v1232
  %1297 = vst.msk [vmem:[%s3 + $0x198] sm:$0xff] %vm78, %v1233
  %1298 = vst.msk [vmem:[%s3 + $0x1a0] sm:$0xff] %vm78, %v1234
  %1299 = vst.msk [vmem:[%s3 + $0x1a8] sm:$0xff] %vm78, %v1235
  %1300 = vst.msk [vmem:[%s3 + $0x1b0] sm:$0xff] %vm78, %v1236
  %1301 = vst.msk [vmem:[%s3 + $0x1b8] sm:$0xff] %vm78, %v1237
  %1302 = vst.msk [vmem:[%s3 + $0x1c0] sm:$0xff] %vm78, %v1238
  %1303 = vst.msk [vmem:[%s3 + $0x1c8] sm:$0xff] %vm78, %v1239
  %1304 = vst.msk [vmem:[%s3 + $0x1d0] sm:$0xff] %vm78, %v1240
  %1305 = vst.msk [vmem:[%s3 + $0x1d8] sm:$0xff] %vm78, %v1241
  %1306 = vst.msk [vmem:[%s3 + $0x1e0] sm:$0xff] %vm78, %v1242
  %1307 = vst.msk [vmem:[%s3 + $0x1e8] sm:$0xff] %vm78, %v1243
  %1308 = vst.msk [vmem:[%s3 + $0x1f0] sm:$0xff] %vm78, %v1244
  %1309 = vst.msk [vmem:[%s3 + $0x1f8] sm:$0xff] %vm78, %v1245
  // Predicated region
  $region14: #{tpu_custom_call.1} parent=0 // pred_check
    _
  $region15: #{tpu_custom_call.1} parent=0 // pred_check_branch
    %1311 = sbr.rel (0) target = $region17
  $region16: #{tpu_custom_call.1} parent=0 // pred_region
    _
  $region17: #{tpu_custom_call.1} parent=0 // pred_fallthru
    _
  // Predicated region
  $region18: #{tpu_custom_call.1} parent=0 // pred_check
    _
  $region19: #{tpu_custom_call.1} parent=0 // pred_check_branch
    %1313 = sbr.rel (0) target = $region21
  $region20: #{tpu_custom_call.1} parent=0 // pred_region
    _
  $region21: #{tpu_custom_call.1} parent=0 // pred_fallthru
    _

</llo_original>
